<compile_context>
chip_gen: v7x
topology: tpu7x:2x2x1
jax: 0.10.0
libtpu: 0.0.40
codegen_flags: <defaults>
</compile_context>

<pallas_src>
import functools

import jax
import jax.numpy as jnp
from jax.experimental import pallas as pl
from jax.experimental.pallas import tpu as pltpu


def _anscombe_dsq(o, t, i, m_total, tile_m):
    """Per-tile (target_A - output_A)^2 in f32, with padded rows zeroed."""
    o = o.astype(jnp.float32)
    t = t.astype(jnp.float32)
    needs_mask = (m_total % tile_m) != 0  # static Python check
    if needs_mask:
        row = jax.lax.broadcasted_iota(jnp.int32, o.shape, 0) + i * tile_m
        valid = row < m_total
        # Sanitize padded rows so rsqrt/sqrt never see garbage (no inf/NaN).
        o = jnp.where(valid, o, 1.0)
        t = jnp.where(valid, t, 1.0)
    a_t = 2.0 * jnp.sqrt(t + 0.375)
    a_o = 2.0 * jnp.sqrt(o + 0.375) - 0.25 * jax.lax.rsqrt(o)
    diff = a_t - a_o
    dsq = diff * diff
    if needs_mask:
        dsq = jnp.where(valid, dsq, 0.0)
    return dsq


def _anscombe_mse_scalar_kernel(o_ref, t_ref, loss_ref, acc_ref, *,
                                m_total, n_total, tile_m):
    i = pl.program_id(0)

    @pl.when(i == 0)
    def _():
        acc_ref[...] = jnp.zeros_like(acc_ref)

    dsq = _anscombe_dsq(o_ref[...], t_ref[...], i, m_total, tile_m)
    # Cheap sublane-axis reduce every step; keep the lane (XLU) reduce for the end.
    acc_ref[...] += jnp.sum(dsq, axis=0, keepdims=True)

    @pl.when(i == pl.num_programs(0) - 1)
    def _():
        loss_ref[0, 0] = jnp.sum(acc_ref[...]) * (1.0 / float(m_total * n_total))


def _anscombe_mse_per_neuron_kernel(o_ref, t_ref, loss_ref, *, m_total, tile_m):
    i = pl.program_id(0)

    @pl.when(i == 0)
    def _():
        loss_ref[...] = jnp.zeros_like(loss_ref)

    dsq = _anscombe_dsq(o_ref[...], t_ref[...], i, m_total, tile_m)
    loss_ref[...] += jnp.sum(dsq, axis=0, keepdims=True)

    @pl.when(i == pl.num_programs(0) - 1)
    def _():
        loss_ref[...] = loss_ref[...] * (1.0 / float(m_total))


def _choose_tile_m(m, n):
    # 2 inputs x 2 pipeline buffers x f32 must fit a conservative VMEM budget
    # (safe for v5e 16 MiB scoped default / v7x 64 MiB physical).
    budget_bytes = 8 * 1024 * 1024
    max_rows = budget_bytes // (2 * 2 * 4 * n)
    max_rows = max(8, min(1024, max_rows))
    if m <= max_rows:
        return m                      # single tile == full dim (always legal)
    return max(8, (max_rows // 8) * 8)  # multiple of 8 (sublane constraint)


def anscombe_mse(output, target, per_neuron=False, tile_m=None):
    assert output.shape == target.shape
    n = output.shape[-1]
    o2 = output.reshape(-1, n)
    t2 = target.reshape(-1, n)
    m = o2.shape[0]

    if tile_m is None:
        tile_m = _choose_tile_m(m, n)
    tile_m = min(tile_m, m)
    grid = (pl.cdiv(m, tile_m),)

    in_specs = [
        pl.BlockSpec((tile_m, n), lambda i: (i, 0)),
        pl.BlockSpec((tile_m, n), lambda i: (i, 0)),
    ]
    compiler_params = pltpu.CompilerParams(
        dimension_semantics=("arbitrary",),  # M is a reduction axis (accumulator)
    )

    if not per_neuron:
        kern = functools.partial(
            _anscombe_mse_scalar_kernel, m_total=m, n_total=n, tile_m=tile_m)
        loss = pl.pallas_call(
            kern,
            out_shape=jax.ShapeDtypeStruct((1, 1), jnp.float32),
            grid_spec=pltpu.PrefetchScalarGridSpec(
                num_scalar_prefetch=0,
                grid=grid,
                in_specs=in_specs,
                out_specs=pl.BlockSpec(memory_space=pltpu.MemorySpace.SMEM),
                scratch_shapes=[pltpu.VMEM((1, n), jnp.float32)],
            ),
            compiler_params=compiler_params,
        )(o2, t2)
        return loss[0, 0]
    else:
        kern = functools.partial(
            _anscombe_mse_per_neuron_kernel, m_total=m, tile_m=tile_m)
        loss = pl.pallas_call(
            kern,
            out_shape=jax.ShapeDtypeStruct((1, n), jnp.float32),
            grid_spec=pltpu.PrefetchScalarGridSpec(
                num_scalar_prefetch=0,
                grid=grid,
                in_specs=in_specs,
                out_specs=pl.BlockSpec((1, n), lambda i: (0, 0)),
            ),
            compiler_params=compiler_params,
        )(o2, t2)
        return loss[0]


def _ref_anscombe_mse(output, target, per_neuron=False):
    a = lambda x: 2.0 * jnp.sqrt(x + 3.0 / 8.0)
    t = a(target)
    o = a(output) - 1.0 / (4.0 * jnp.sqrt(output))
    loss = (t - o) ** 2
    if not per_neuron:
        return loss.mean()
    return loss.reshape(-1, loss.shape[-1]).mean(axis=0)


if __name__ == "__main__":
    key = jax.random.PRNGKey(0)
    k1, k2 = jax.random.split(key)
    # Small shapes consistent with (batch..., neurons) response tensors.
    shape = (2, 10, 128)  # flattens to (20, 128)
    # Strictly positive "firing rate" style model outputs (sqrt(output) finite).
    output = jax.random.uniform(k1, shape, jnp.float32, 0.1, 3.0)
    target = jax.random.uniform(k2, shape, jnp.float32, 0.0, 3.0)

    ref = _ref_anscombe_mse(output, target, per_neuron=False)
    ref_pn = _ref_anscombe_mse(output, target, per_neuron=True)

    # Default tiling (single tile covers the whole 20-row input).
    loss = anscombe_mse(output, target, per_neuron=False)
    jax.block_until_ready(loss)
    assert jnp.allclose(loss, ref, rtol=1e-5, atol=1e-5), (loss, ref)

    loss_pn = anscombe_mse(output, target, per_neuron=True)
    jax.block_until_ready(loss_pn)
    assert jnp.allclose(loss_pn, ref_pn, rtol=1e-5, atol=1e-5)

    # Forced small tile: exercises the multi-step reduction grid, the resident
    # accumulator, and the padded-row masking (20 rows / tile 8 -> 4 pad rows).
    loss_t = anscombe_mse(output, target, per_neuron=False, tile_m=8)
    jax.block_until_ready(loss_t)
    assert jnp.allclose(loss_t, ref, rtol=1e-5, atol=1e-5), (loss_t, ref)

    loss_pn_t = anscombe_mse(output, target, per_neuron=True, tile_m=8)
    jax.block_until_ready(loss_pn_t)
    assert jnp.allclose(loss_pn_t, ref_pn, rtol=1e-5, atol=1e-5)

    print("KERNEL_OK")
</pallas_src>

<mosaic_0001>
module attributes {stable_mosaic.version = 11 : i64} {
  func.func @_anscombe_mse_scalar_kernel(%arg0: i32, %arg1: memref<20x128xf32, #tpu.memory_space<vmem>>, %arg2: memref<20x128xf32, #tpu.memory_space<vmem>>, %arg3: memref<1x1xf32, #tpu.memory_space<smem>>, %arg4: memref<1x128xf32, #tpu.memory_space<vmem>>) attributes {dimension_semantics = [#tpu.dimension_semantics<arbitrary>], iteration_bounds = array<i64: 1>, scalar_prefetch = 0 : i64, scratch_operands = 1 : i64, tpu.core_type = #tpu.core_type<tc>, window_params = [{transform_indices = @transform_0, window_bounds = array<i64: 20, 128>}, {transform_indices = @transform_1, window_bounds = array<i64: 20, 128>}, {transform_indices = @transform_2, window_bounds = array<i64: 1, 1>}]} {
    %c0_i32 = arith.constant 0 : i32
    %0 = arith.cmpi eq, %arg0, %c0_i32 : i32
    %1 = arith.extui %0 : i1 to i32
    %c0_i32_0 = arith.constant 0 : i32
    %2 = arith.cmpi ne, %1, %c0_i32_0 : i32
    scf.if %2 {
      %cst_15 = arith.constant 0.000000e+00 : f32
      %29 = vector.broadcast %cst_15 : f32 to vector<1x128xf32>
      %c0_16 = arith.constant 0 : index
      %c0_17 = arith.constant 0 : index
      %30 = vector.load %arg4[%c0_16, %c0_17] : memref<1x128xf32, #tpu.memory_space<vmem>>, vector<1x128xf32>
      tpu.vector_store %arg4[%c0_16, %c0_17], %29 {strides = array<i32>} : memref<1x128xf32, #tpu.memory_space<vmem>>, vector<1x128xf32>,
    } else {
    }
    %c0 = arith.constant 0 : index
    %c0_1 = arith.constant 0 : index
    %3 = vector.load %arg1[%c0, %c0_1] : memref<20x128xf32, #tpu.memory_space<vmem>>, vector<20x128xf32>
    %c0_2 = arith.constant 0 : index
    %c0_3 = arith.constant 0 : index
    %4 = vector.load %arg2[%c0_2, %c0_3] : memref<20x128xf32, #tpu.memory_space<vmem>>, vector<20x128xf32>
    %cst = arith.constant 3.750000e-01 : f32
    %5 = vector.broadcast %cst : f32 to vector<20x128xf32>
    %6 = arith.addf %4, %5 : vector<20x128xf32>
    %7 = math.sqrt %6 : vector<20x128xf32>
    %cst_4 = arith.constant 2.000000e+00 : f32
    %8 = vector.broadcast %cst_4 : f32 to vector<20x128xf32>
    %9 = arith.mulf %8, %7 : vector<20x128xf32>
    %cst_5 = arith.constant 3.750000e-01 : f32
    %10 = vector.broadcast %cst_5 : f32 to vector<20x128xf32>
    %11 = arith.addf %3, %10 : vector<20x128xf32>
    %12 = math.sqrt %11 : vector<20x128xf32>
    %cst_6 = arith.constant 2.000000e+00 : f32
    %13 = vector.broadcast %cst_6 : f32 to vector<20x128xf32>
    %14 = arith.mulf %13, %12 : vector<20x128xf32>
    %15 = math.rsqrt %3 : vector<20x128xf32>
    %cst_7 = arith.constant 2.500000e-01 : f32
    %16 = vector.broadcast %cst_7 : f32 to vector<20x128xf32>
    %17 = arith.mulf %16, %15 : vector<20x128xf32>
    %18 = arith.subf %14, %17 : vector<20x128xf32>
    %19 = arith.subf %9, %18 : vector<20x128xf32>
    %20 = arith.mulf %19, %19 : vector<20x128xf32>
    %c0_8 = arith.constant 0 : index
    %c0_9 = arith.constant 0 : index
    %21 = vector.load %arg4[%c0_8, %c0_9] : memref<1x128xf32, #tpu.memory_space<vmem>>, vector<1x128xf32>
    %cst_10 = arith.constant dense<0.000000e+00> : vector<128xf32>
    %22 = vector.multi_reduction <add>, %20, %cst_10 [0] : vector<20x128xf32> to vector<128xf32>
    %23 = vector.shape_cast %22 : vector<128xf32> to vector<1x128xf32>
    %24 = arith.addf %21, %23 : vector<1x128xf32>
    %c0_11 = arith.constant 0 : index
    %c0_12 = arith.constant 0 : index
    %25 = vector.load %arg4[%c0_11, %c0_12] : memref<1x128xf32, #tpu.memory_space<vmem>>, vector<1x128xf32>
    tpu.vector_store %arg4[%c0_11, %c0_12], %24 {strides = array<i32>} : memref<1x128xf32, #tpu.memory_space<vmem>>, vector<1x128xf32>,
    %c0_i32_13 = arith.constant 0 : i32
    %26 = arith.cmpi eq, %arg0, %c0_i32_13 : i32
    %27 = arith.extui %26 : i1 to i32
    %c0_i32_14 = arith.constant 0 : i32
    %28 = arith.cmpi ne, %27, %c0_i32_14 : i32
    scf.if %28 {
      %c0_15 = arith.constant 0 : index
      %c0_16 = arith.constant 0 : index
      %29 = vector.load %arg4[%c0_15, %c0_16] : memref<1x128xf32, #tpu.memory_space<vmem>>, vector<1x128xf32>
      %30 = vector.shape_cast %29 : vector<1x128xf32> to vector<1x1x128xf32>
      %cst_17 = arith.constant dense<0.000000e+00> : vector<1xf32>
      %31 = vector.multi_reduction <add>, %30, %cst_17 [1, 2] : vector<1x1x128xf32> to vector<1xf32>
      %32 = vector.shape_cast %31 : vector<1xf32> to vector<1x1x1xf32>
      %33 = vector.extract %32[0, 0, 0] : f32 from vector<1x1x1xf32>
      %cst_18 = arith.constant 3.906250e-04 : f32
      %34 = arith.mulf %33, %cst_18 : f32
      %c0_19 = arith.constant 0 : index
      %c0_20 = arith.constant 0 : index
      %35 = memref.load %arg3[%c0_19, %c0_20] : memref<1x1xf32, #tpu.memory_space<smem>>
      memref.store %34, %arg3[%c0_19, %c0_20] : memref<1x1xf32, #tpu.memory_space<smem>>
    } else {
    }
    return
  }
  func.func @transform_0(%arg0: i32) -> (i32, i32) {
    %c0_i32 = arith.constant 0 : i32
    %c0_i32_0 = arith.constant 0 : i32
    return %arg0, %c0_i32 : i32, i32
  }
  func.func @transform_1(%arg0: i32) -> (i32, i32) {
    %c0_i32 = arith.constant 0 : i32
    %c0_i32_0 = arith.constant 0 : i32
    return %arg0, %c0_i32 : i32, i32
  }
  func.func @transform_2(%arg0: i32) -> (i32, i32) {
    %c0_i32 = arith.constant 0 : i32
    %c0_i32_0 = arith.constant 0 : i32
    %c0_i32_1 = arith.constant 0 : i32
    return %c0_i32, %c0_i32_0 : i32, i32
  }
}

</mosaic_0001>

<llo_original>
// kernel: tpu_custom_call.1
$region0: #{tpu_custom_call.1}
  #allocation0 [shape = 'u32[]', space=smem, size = 0x4, offset = 0x4, fixed_abs, tag = 'smem constant byte address 0x4 - core index']
  #allocation1 [shape = 'u32[144,128]{1,0:T(1,128)}', space=vmem, size = 0x12000, scoped, tag = 'internal scratch']
  #allocation2 [shape = 'f32[1,128]{1,0:T(1,128)}', space=vmem, size = 0x200, scoped, tag = 'scratch operand']
  %s0 = inlined_call_operand.hbm [shape: f32[20,128], index: 0, kind: input, shape index: {}]
  %s1 = inlined_call_operand.hbm [shape: f32[20,128], index: 1, kind: input, shape index: {}]
  %s2 = inlined_call_operand.hbm [shape: f32[1,1], index: 2, kind: output, shape index: {}]
  %s3 = sld [smem:[#allocation0]]
  $region34: #{tpu_custom_call.1} parent=0
    _
  %s5 = ssub.s32 1, %s3
  %s6 = scalar_select 0, %s5, %s3
  $region1: #{tpu_custom_call.1} parent=0
    #allocation3 [shape = 'u8[12288]{0}', space=vmem, size = 0x3000, scoped, tag = 'input window, operand 0, single buffered']
    #allocation4 [shape = 's32[1]{0}', space=sflag, size = 0x4, scoped, tag = 'scoped memory for tpu_custom_call.1']
    #allocation5 [shape = 's32[1]{0}', space=sflag, size = 0x4, scoped, tag = 'scoped memory for tpu_custom_call.1']
    #allocation6 [shape = 'u8[12288]{0}', space=vmem, size = 0x3000, scoped, tag = 'input window, operand 1, single buffered']
    #allocation7 [shape = 's32[1]{0}', space=sflag, size = 0x4, scoped, tag = 'scoped memory for tpu_custom_call.1']
    #allocation8 [shape = 'u8[512]{0}', space=smem, size = 0x200, scoped, tag = 'output window, operand 0, single buffered']
    %7 = vsyncpa [#allocation4], 0
    %8 = vsyncpa [#allocation7], 0
    %9 = vsyncpa [#allocation5], 0
    // Predicated region
    $region2: #{tpu_custom_call.1} parent=1 // pred_check
      _
    $region3: #{tpu_custom_call.1} parent=1 // pred_check_branch
      %11 = sbr.rel (0) target = $region5
    $region4: #{tpu_custom_call.1} parent=1 // pred_region
      %s13 = ssub.s32 384, 384
      %14 = vsyncadd [#allocation4], %s13
      %s15 = sshll.u32 [#allocation3], 4
      %s16 = int_to_ptr.vmem [resolvable:$true] %s15
      %21 = dma.hbm_to_vmem [thread:$0]  %s0, 384, %s16, [#allocation4], 128, 128, 8
    $region5: #{tpu_custom_call.1} parent=1 // pred_fallthru
      _
    // Predicated region
    $region6: #{tpu_custom_call.1} parent=1 // pred_check
      _
    $region7: #{tpu_custom_call.1} parent=1 // pred_check_branch
      %23 = sbr.rel (0) target = $region9
    $region8: #{tpu_custom_call.1} parent=1 // pred_region
      %s25 = ssub.s32 384, 384
      %26 = vsyncadd [#allocation7], %s25
      %s27 = sshll.u32 [#allocation6], 4
      %s28 = int_to_ptr.vmem [resolvable:$true] %s27
      %33 = dma.hbm_to_vmem [thread:$0]  %s1, 384, %s28, [#allocation7], 128, 128, 8
    $region9: #{tpu_custom_call.1} parent=1 // pred_fallthru
      _
    // Predicated region
    $region10: #{tpu_custom_call.1} parent=1 // pred_check
      _
    $region11: #{tpu_custom_call.1} parent=1 // pred_check_branch
      %35 = sbr.rel (0) target = $region13
    $region12: #{tpu_custom_call.1} parent=1 // pred_region
      %36 = dma.done [#allocation4], 384
    $region13: #{tpu_custom_call.1} parent=1 // pred_fallthru
      _
    // Predicated region
    $region14: #{tpu_custom_call.1} parent=1 // pred_check
      _
    $region15: #{tpu_custom_call.1} parent=1 // pred_check_branch
      %38 = sbr.rel (0) target = $region17
    $region16: #{tpu_custom_call.1} parent=1 // pred_region
      %39 = dma.done [#allocation7], 384
    $region17: #{tpu_custom_call.1} parent=1 // pred_fallthru
      _
    %p40 = scmp.eq.s32.totalorder 0, 0
    // Predicated region
    $region18: #{tpu_custom_call.1} parent=1 // pred_check
      %p41 = pneg %p40
    $region19: #{tpu_custom_call.1} parent=1 // pred_check_branch
      %43 = sbr.rel (%p41) target = $region21
    $region20: #{tpu_custom_call.1} parent=1 // pred_region
      %44 = vst [vmem:[#allocation2] sm:$0x1] 0.0
    $region21: #{tpu_custom_call.1} parent=1 // pred_fallthru
      _
    %v45 = vld [vmem:[#allocation3] sm:$0xff]
    %v46 = vld [vmem:[#allocation3 + $0x8] sm:$0xff]
    %v47 = vld [vmem:[#allocation3 + $0x10] sm:$0xf]
    %v48 = vld [vmem:[#allocation6] sm:$0xff]
    %v49 = vld [vmem:[#allocation6 + $0x8] sm:$0xff]
    %v50 = vld [vmem:[#allocation6 + $0x10] sm:$0xf]
    %v51 = vadd.f32 %v48, 0.375
    %v52 = vadd.f32 %v49, 0.375
    %v53 = vadd.f32 %v50, 0.375
    %v54 = vrsqrt.pop %v51
    %v55 = vmul.f32 %v51, %v54
    %vm56 = vcmp.eq.f32.partialorder %v51, inf
    %v57 = vsel %vm56, %v51, %v55
    %vm58 = vcmp.eq.f32.partialorder %v51, 0.0
    %v59 = vand.u32 %v51, 2147483648
    %v60 = vsel %vm58, %v59, %v57
    %v61 = vrsqrt.pop %v52
    %v62 = vmul.f32 %v52, %v61
    %vm63 = vcmp.eq.f32.partialorder %v52, inf
    %v64 = vsel %vm63, %v52, %v62
    %vm65 = vcmp.eq.f32.partialorder %v52, 0.0
    %v66 = vand.u32 %v52, 2147483648
    %v67 = vsel %vm65, %v66, %v64
    %v68 = vrsqrt.pop %v53
    %v69 = vmul.f32 %v53, %v68
    %vm70 = vcmp.eq.f32.partialorder %v53, inf
    %v71 = vsel %vm70, %v53, %v69
    %vm72 = vcmp.eq.f32.partialorder %v53, 0.0
    %v73 = vand.u32 %v53, 2147483648
    %v74 = vsel %vm72, %v73, %v71
    %v75 = vmul.f32 %v60, 2.0
    %v76 = vmul.f32 %v67, 2.0
    %v77 = vmul.f32 %v74, 2.0
    %v78 = vadd.f32 %v45, 0.375
    %v79 = vadd.f32 %v46, 0.375
    %v80 = vadd.f32 %v47, 0.375
    %v81 = vrsqrt.pop %v78
    %v82 = vmul.f32 %v78, %v81
    %vm83 = vcmp.eq.f32.partialorder %v78, inf
    %v84 = vsel %vm83, %v78, %v82
    %vm85 = vcmp.eq.f32.partialorder %v78, 0.0
    %v86 = vand.u32 %v78, 2147483648
    %v87 = vsel %vm85, %v86, %v84
    %v88 = vrsqrt.pop %v79
    %v89 = vmul.f32 %v79, %v88
    %vm90 = vcmp.eq.f32.partialorder %v79, inf
    %v91 = vsel %vm90, %v79, %v89
    %vm92 = vcmp.eq.f32.partialorder %v79, 0.0
    %v93 = vand.u32 %v79, 2147483648
    %v94 = vsel %vm92, %v93, %v91
    %v95 = vrsqrt.pop %v80
    %v96 = vmul.f32 %v80, %v95
    %vm97 = vcmp.eq.f32.partialorder %v80, inf
    %v98 = vsel %vm97, %v80, %v96
    %vm99 = vcmp.eq.f32.partialorder %v80, 0.0
    %v100 = vand.u32 %v80, 2147483648
    %v101 = vsel %vm99, %v100, %v98
    %v102 = vmul.f32 %v87, 2.0
    %v103 = vmul.f32 %v94, 2.0
    %v104 = vmul.f32 %v101, 2.0
    %v105 = vrsqrt.pop %v45
    %v106 = vrsqrt.pop %v46
    %v107 = vrsqrt.pop %v47
    %v108 = vmul.f32 %v105, 0.25
    %v109 = vmul.f32 %v106, 0.25
    %v110 = vmul.f32 %v107, 0.25
    %v111 = vsub.f32 %v102, %v108
    %v112 = vsub.f32 %v103, %v109
    %v113 = vsub.f32 %v104, %v110
    %v114 = vsub.f32 %v75, %v111
    %v115 = vsub.f32 %v76, %v112
    %v116 = vsub.f32 %v77, %v113
    %v117 = vmul.f32 %v114, %v114
    %v118 = vmul.f32 %v115, %v115
    %v119 = vmul.f32 %v116, %v116
    %v120 = vld [vmem:[#allocation2] sm:$0x1]
    %v121 = vadd.f32 %v117, %v118
    %vm122 = vcmask 1043456
    %v123 = vsel %vm122, %v119, 0.0
    %v124 = vadd.f32 %v121, %v123
    %v125 = vrot.slane %v124, 4
    %v126 = vadd.f32 %v124, %v125
    %v127 = vrot.slane %v126, 2
    %v128 = vadd.f32 %v126, %v127
    %v129 = vrot.slane %v128, 1
    %v130 = vadd.f32 %v128, %v129
    %v131 = vadd.f32 %v120, %v130
    %132 = vst [vmem:[#allocation2] sm:$0x1] %v131
    // Predicated region
    $region22: #{tpu_custom_call.1} parent=1 // pred_check
      %p133 = pneg %p40
    $region23: #{tpu_custom_call.1} parent=1 // pred_check_branch
      %135 = sbr.rel (%p133) target = $region25
    $region24: #{tpu_custom_call.1} parent=1 // pred_region
      %v136 = vld [vmem:[#allocation2] sm:$0x1]
      %vm137 = vcmask 1040384
      %v138 = vsel %vm137, %v136, 0.0
      %139 = vadd.xlane.f32.xlu0 %v138
      %v140 = vpop.xlane.xlu0 %139
      %v141 = vrot.slane %v140, 4
      %v142 = vadd.f32 %v140, %v141
      %v143 = vrot.slane %v142, 2
      %v144 = vadd.f32 %v142, %v143
      %v145 = vrot.slane %v144, 1
      %v146 = vadd.f32 %v144, %v145
      %s147 = vtos %v146
      %s148 = smul.f32 %s147, 0.000390625
      %s149 = scalar_lea.smem [#allocation8], 0
      %150 = sst [smem:[%s149]] %s148
    $region25: #{tpu_custom_call.1} parent=1 // pred_fallthru
      _
    // Predicated region
    $region26: #{tpu_custom_call.1} parent=1 // pred_check
      _
    $region27: #{tpu_custom_call.1} parent=1 // pred_check_branch
      %152 = sbr.rel (0) target = $region29
    $region28: #{tpu_custom_call.1} parent=1 // pred_region
      %s154 = ssub.s32 16, 16
      %155 = vsyncadd [#allocation5], %s154
      %158 = dma.smem_to_hbm [#allocation8], 16, %s2, [#allocation5]
    $region29: #{tpu_custom_call.1} parent=1 // pred_fallthru
      _
    // Predicated region
    $region30: #{tpu_custom_call.1} parent=1 // pred_check
      _
    $region31: #{tpu_custom_call.1} parent=1 // pred_check_branch
      %160 = sbr.rel (0) target = $region33
    $region32: #{tpu_custom_call.1} parent=1 // pred_region
      %161 = dma.done [#allocation5], 16
    $region33: #{tpu_custom_call.1} parent=1 // pred_fallthru
      _
    %162 = sfence
    %163 = vsyncpa [#allocation4], 1
    %164 = vsyncpa [#allocation7], 1
    %165 = vsyncpa [#allocation5], 1

</llo_original>
